<compile_context>
chip_gen: v5e
topology: v5e:2x2
jax: 0.10.0
libtpu: 0.0.40
codegen_flags: <defaults>
</compile_context>

<pallas_src>
import functools
import math

import jax
import jax.numpy as jnp
import numpy as np
from jax.experimental import pallas as pl
from jax.experimental.pallas import tpu as pltpu


# ---------------------------------------------------------------------------
# Kernels
# ---------------------------------------------------------------------------
def _tsne_kernel(alpha, emb_ref, cent_t_ref, cent_sq_ref, out_ref):
    """Student-t (t-SNE style) soft assignment, normalized over classes."""
    x = emb_ref[...]                                  # (TB, D), native dtype -> MXU
    # Cross term on the MXU; accumulate in f32.
    cross = jnp.dot(x, cent_t_ref[...], preferred_element_type=jnp.float32)   # (TB, K)
    xf = x.astype(jnp.float32)
    x_sq = jnp.sum(xf * xf, axis=-1, keepdims=True)   # (TB, 1)
    # ||x-c||^2 via the matmul identity; clamp tiny negative cancellation noise.
    norm_sq = jnp.maximum(x_sq + cent_sq_ref[...] - 2.0 * cross, 0.0)         # (TB, K)

    if alpha == 1.0:
        # power == 1 -> the pow is a no-op; single EUP reciprocal.
        numerator = pl.reciprocal(1.0 + norm_sq, approx=True)
    else:
        # (1/(1+z))**p == exp(-p * log(1+z)): one log + one exp on the EUP.
        power = (alpha + 1.0) / 2.0
        numerator = jnp.exp(-power * jnp.log(1.0 + norm_sq / alpha))

    denom = jnp.sum(numerator, axis=-1, keepdims=True)
    out_ref[...] = numerator * pl.reciprocal(denom, approx=True)


def _cosine_kernel(inv_scale, emb_ref, cent_t_ref, out_ref):
    """Scaled dot-product scores + softmax over classes."""
    scores = jnp.dot(emb_ref[...], cent_t_ref[...],
                     preferred_element_type=jnp.float32) * inv_scale          # (TB, K)
    m = jnp.max(scores, axis=-1, keepdims=True)
    e = jnp.exp(scores - m)
    out_ref[...] = e * pl.reciprocal(jnp.sum(e, axis=-1, keepdims=True), approx=True)


# ---------------------------------------------------------------------------
# Wrapper (the "module")
# ---------------------------------------------------------------------------
def soft_assignment(test_emb, cluster_centroid, *, metric='t-sne', alpha=1.0,
                    block_rows=1024):
    """Pallas implementation of SoftAssignment.forward.

    test_emb:          [B, D]
    cluster_centroid:  [K, D]
    returns:           [B, K] float32
    """
    B, D = test_emb.shape
    K, D2 = cluster_centroid.shape
    assert D == D2, "embedding dims must match"

    # Layout plumbing outside the kernel: contraction dim on sublanes, K on lanes.
    cent_t = jnp.transpose(cluster_centroid)                      # (D, K), native dtype
    cent_sq = jnp.sum(cluster_centroid.astype(jnp.float32) ** 2,
                      axis=-1, keepdims=True).T                   # (1, K) f32

    # Row tile over the batch axis: as large as comfortably fits VMEM, mult. of 8.
    TB = min(block_rows, max(B, 8))
    TB = max(8, (TB // 8) * 8)
    Bp = ((B + TB - 1) // TB) * TB
    if Bp != B:
        test_emb = jnp.pad(test_emb, ((0, Bp - B), (0, 0)))
    grid = (Bp // TB,)

    if metric == 't-sne':
        kernel = functools.partial(_tsne_kernel, float(alpha))
        in_specs = [
            pl.BlockSpec((TB, D), lambda i: (i, 0)),
            pl.BlockSpec((D, K), lambda i: (0, 0)),
            pl.BlockSpec((1, K), lambda i: (0, 0)),
        ]
        operands = (test_emb, cent_t, cent_sq)
    elif metric == 'cosine':
        kernel = functools.partial(_cosine_kernel, 1.0 / math.sqrt(float(D)))
        in_specs = [
            pl.BlockSpec((TB, D), lambda i: (i, 0)),
            pl.BlockSpec((D, K), lambda i: (0, 0)),
        ]
        operands = (test_emb, cent_t)
    else:
        raise RuntimeError('No such metric')

    out = pl.pallas_call(
        kernel,
        out_shape=jax.ShapeDtypeStruct((Bp, K), jnp.float32),
        grid=grid,
        in_specs=in_specs,
        out_specs=pl.BlockSpec((TB, K), lambda i: (i, 0)),
        compiler_params=pltpu.CompilerParams(
            dimension_semantics=("parallel",)),   # megacore-shardable batch axis
    )(*operands)

    if Bp != B:
        out = out[:B]
    return out


# ---------------------------------------------------------------------------
# Pure-JAX references (for correctness checking)
# ---------------------------------------------------------------------------
def _tsne_ref(x, c, alpha=1.0):
    norm_sq = jnp.sum((x[:, None, :] - c[None, :, :]) ** 2, axis=2)
    num = (1.0 / (1.0 + norm_sq / alpha)) ** ((alpha + 1.0) / 2.0)
    return num / jnp.sum(num, axis=1, keepdims=True)


def _cosine_ref(x, c):
    scale = jnp.sqrt(jnp.float32(x.shape[-1]))
    scores = x @ c.T / scale
    return jax.nn.softmax(scores, axis=-1)


# ---------------------------------------------------------------------------
if __name__ == "__main__":
    # Small, module-consistent shapes: batch=8 samples, 8 classes, 32-d embedding.
    B, K, D = 8, 8, 32

    key = jax.random.PRNGKey(0)
    k_emb, k_cent = jax.random.split(key)
    test_emb = jax.random.normal(k_emb, (B, D), dtype=jnp.float32)
    # Deterministic synthetic "cluster centroids" (stand-in for get_mean(ref_adata)).
    cluster_centroid = jax.random.normal(k_cent, (K, D), dtype=jnp.float32)

    out_tsne = soft_assignment(test_emb, cluster_centroid, metric='t-sne', alpha=1.0)
    out_tsne_a2 = soft_assignment(test_emb, cluster_centroid, metric='t-sne', alpha=2.0)
    out_cos = soft_assignment(test_emb, cluster_centroid, metric='cosine')
    jax.block_until_ready(out_tsne)
    jax.block_until_ready(out_tsne_a2)
    jax.block_until_ready(out_cos)

    # Verify against plain-JAX references (tolerance loosened slightly for the
    # approx-reciprocal EUP path).
    ref_tsne = _tsne_ref(test_emb, cluster_centroid, 1.0)
    ref_tsne_a2 = _tsne_ref(test_emb, cluster_centroid, 2.0)
    ref_cos = _cosine_ref(test_emb, cluster_centroid)
    assert np.allclose(np.asarray(out_tsne), np.asarray(ref_tsne), atol=5e-3, rtol=5e-3)
    assert np.allclose(np.asarray(out_tsne_a2), np.asarray(ref_tsne_a2), atol=5e-3, rtol=5e-3)
    assert np.allclose(np.asarray(out_cos), np.asarray(ref_cos), atol=5e-3, rtol=5e-3)
    # Rows sum to ~1 (probability distributions).
    assert np.allclose(np.asarray(out_tsne).sum(-1), 1.0, atol=5e-3)
    assert np.allclose(np.asarray(out_tsne_a2).sum(-1), 1.0, atol=5e-3)
    assert np.allclose(np.asarray(out_cos).sum(-1), 1.0, atol=5e-3)

    print("KERNEL_OK")
</pallas_src>

<mosaic_0001>
module attributes {stable_mosaic.version = 11 : i64} {
  func.func @_tsne_kernel(%arg0: i32, %arg1: memref<8x32xf32, #tpu.memory_space<vmem>>, %arg2: memref<32x8xf32, #tpu.memory_space<vmem>>, %arg3: memref<1x8xf32, #tpu.memory_space<vmem>>, %arg4: memref<8x8xf32, #tpu.memory_space<vmem>>) attributes {dimension_semantics = [#tpu.dimension_semantics<parallel>], iteration_bounds = array<i64: 1>, scalar_prefetch = 0 : i64, scratch_operands = 0 : i64, tpu.core_type = #tpu.core_type<tc>, window_params = [{transform_indices = @transform_0, window_bounds = array<i64: 8, 32>}, {pipeline_mode = #tpu.pipeline_mode<synchronous>, transform_indices = @transform_1, window_bounds = array<i64: 32, 8>}, {pipeline_mode = #tpu.pipeline_mode<synchronous>, transform_indices = @transform_2, window_bounds = array<i64: 1, 8>}, {transform_indices = @transform_3, window_bounds = array<i64: 8, 8>}]} {
    %c0 = arith.constant 0 : index
    %c0_0 = arith.constant 0 : index
    %0 = vector.load %arg1[%c0, %c0_0] : memref<8x32xf32, #tpu.memory_space<vmem>>, vector<8x32xf32>
    %c0_1 = arith.constant 0 : index
    %c0_2 = arith.constant 0 : index
    %1 = vector.load %arg2[%c0_1, %c0_2] : memref<32x8xf32, #tpu.memory_space<vmem>>, vector<32x8xf32>
    %cst = arith.constant dense<0.000000e+00> : vector<8x8xf32>
    %2 = tpu.matmul %0, %1, %cst {dimension_numbers = #tpu.dot_dimension_numbers<[1], [0], [0], [1], [0, 0, 1, 1], [], []>} : vector<8x32xf32>, vector<32x8xf32>, vector<8x8xf32> -> vector<8x8xf32>
    %3 = arith.mulf %0, %0 : vector<8x32xf32>
    %cst_3 = arith.constant dense<0.000000e+00> : vector<8xf32>
    %4 = vector.multi_reduction <add>, %3, %cst_3 [1] : vector<8x32xf32> to vector<8xf32>
    %5 = vector.shape_cast %4 : vector<8xf32> to vector<8x1xf32>
    %c0_4 = arith.constant 0 : index
    %c0_5 = arith.constant 0 : index
    %6 = vector.load %arg3[%c0_4, %c0_5] : memref<1x8xf32, #tpu.memory_space<vmem>>, vector<1x8xf32>
    %7 = vector.broadcast %5 : vector<8x1xf32> to vector<8x8xf32>
    %8 = vector.broadcast %6 : vector<1x8xf32> to vector<8x8xf32>
    %9 = arith.addf %7, %8 : vector<8x8xf32>
    %cst_6 = arith.constant 2.000000e+00 : f32
    %10 = vector.broadcast %cst_6 : f32 to vector<8x8xf32>
    %11 = arith.mulf %10, %2 : vector<8x8xf32>
    %12 = arith.subf %9, %11 : vector<8x8xf32>
    %cst_7 = arith.constant 0.000000e+00 : f32
    %13 = vector.broadcast %cst_7 : f32 to vector<8x8xf32>
    %14 = arith.maximumf %12, %13 : vector<8x8xf32>
    %cst_8 = arith.constant 1.000000e+00 : f32
    %15 = vector.broadcast %cst_8 : f32 to vector<8x8xf32>
    %16 = arith.addf %15, %14 : vector<8x8xf32>
    %17 = tpu.reciprocal %16 {approx = true} : vector<8x8xf32> -> vector<8x8xf32>
    %cst_9 = arith.constant dense<0.000000e+00> : vector<8xf32>
    %18 = vector.multi_reduction <add>, %17, %cst_9 [1] : vector<8x8xf32> to vector<8xf32>
    %19 = vector.shape_cast %18 : vector<8xf32> to vector<8x1xf32>
    %20 = tpu.reciprocal %19 {approx = true} : vector<8x1xf32> -> vector<8x1xf32>
    %21 = vector.broadcast %20 : vector<8x1xf32> to vector<8x8xf32>
    %22 = arith.mulf %17, %21 : vector<8x8xf32>
    %c0_10 = arith.constant 0 : index
    %c0_11 = arith.constant 0 : index
    %23 = vector.load %arg4[%c0_10, %c0_11] : memref<8x8xf32, #tpu.memory_space<vmem>>, vector<8x8xf32>
    tpu.vector_store %arg4[%c0_10, %c0_11], %22 {strides = array<i32>} : memref<8x8xf32, #tpu.memory_space<vmem>>, vector<8x8xf32>,
    return
  }
  func.func @transform_0(%arg0: i32) -> (i32, i32) {
    %c0_i32 = arith.constant 0 : i32
    %c0_i32_0 = arith.constant 0 : i32
    return %arg0, %c0_i32 : i32, i32
  }
  func.func @transform_1(%arg0: i32) -> (i32, i32) {
    %c0_i32 = arith.constant 0 : i32
    %c0_i32_0 = arith.constant 0 : i32
    %c0_i32_1 = arith.constant 0 : i32
    return %c0_i32, %c0_i32_0 : i32, i32
  }
  func.func @transform_2(%arg0: i32) -> (i32, i32) {
    %c0_i32 = arith.constant 0 : i32
    %c0_i32_0 = arith.constant 0 : i32
    %c0_i32_1 = arith.constant 0 : i32
    return %c0_i32, %c0_i32_0 : i32, i32
  }
  func.func @transform_3(%arg0: i32) -> (i32, i32) {
    %c0_i32 = arith.constant 0 : i32
    %c0_i32_0 = arith.constant 0 : i32
    return %arg0, %c0_i32 : i32, i32
  }
}

</mosaic_0001>

<llo_original>
// kernel: tpu_custom_call.1
$region0: #{tpu_custom_call.1}
  #allocation0 [shape = 'u32[]', space=smem, size = 0x4, offset = 0x4, fixed_abs, tag = 'smem constant byte address 0x4 - core index']
  #allocation1 [shape = 'u32[72,128]{1,0:T(1,128)}', space=vmem, size = 0x9000, scoped, tag = 'internal scratch']
  %s0 = inlined_call_operand.vmem [shape: f32[8,32], index: 0, kind: input, shape index: {}]
  %s1 = inlined_call_operand.vmem [shape: f32[32,8], index: 1, kind: input, shape index: {}]
  %s2 = inlined_call_operand.vmem [shape: f32[1,8], index: 2, kind: input, shape index: {}]
  %s3 = inlined_call_operand.hbm [shape: f32[8,8], index: 3, kind: output, shape index: {}]
  %s4 = sld [smem:[#allocation0]]
  $region22: #{tpu_custom_call.1} parent=0
    _
  %s6 = ssub.s32 1, %s4
  %s7 = scalar_select 0, %s6, %s4
  $region1: #{tpu_custom_call.1} parent=0
    #allocation2 [shape = 'u8[4096]{0}', space=vmem, size = 0x1000, scoped, tag = 'output window, operand 0, single buffered']
    #allocation3 [shape = 's32[1]{0}', space=sflag, size = 0x4, scoped, tag = 'scoped memory for tpu_custom_call.1']
    %8 = vsyncpa [#allocation3], 0
    // Predicated region
    $region2: #{tpu_custom_call.1} parent=1 // pred_check
      _
    $region3: #{tpu_custom_call.1} parent=1 // pred_check_branch
      %10 = sbr.rel (0) target = $region5
    $region4: #{tpu_custom_call.1} parent=1 // pred_region
      _
    $region5: #{tpu_custom_call.1} parent=1 // pred_fallthru
      _
    // Predicated region
    $region6: #{tpu_custom_call.1} parent=1 // pred_check
      _
    $region7: #{tpu_custom_call.1} parent=1 // pred_check_branch
      %12 = sbr.rel (0) target = $region9
    $region8: #{tpu_custom_call.1} parent=1 // pred_region
      _
    $region9: #{tpu_custom_call.1} parent=1 // pred_fallthru
      _
    // Predicated region
    $region10: #{tpu_custom_call.1} parent=1 // pred_check
      _
    $region11: #{tpu_custom_call.1} parent=1 // pred_check_branch
      %14 = sbr.rel (0) target = $region13
    $region12: #{tpu_custom_call.1} parent=1 // pred_region
      _
    $region13: #{tpu_custom_call.1} parent=1 // pred_fallthru
      _
    %v15 = vld [vmem:[%s0] sm:$0xff]
    %v16 = vld [vmem:[%s1] sm:$0xff]
    %v17 = vld [vmem:[%s1 + $0x8] sm:$0xff]
    %v18 = vld [vmem:[%s1 + $0x10] sm:$0xff]
    %v19 = vld [vmem:[%s1 + $0x18] sm:$0xff]
    %vm20 = vcmask 261120
    %v22 = vsel %vm20, %v15, 0
    %24 = vmatpush.msra.mxu0 0.0
    %25 = vmatpush.msra.mxu0 0.0
    %26 = vmatpush.msra.mxu0 0.0
    %27 = vmatpush.msra.mxu0 0.0
    %28 = vmatpush.msra.mxu0 0.0
    %29 = vmatpush.msra.mxu0 0.0
    %30 = vmatpush.msra.mxu0 0.0
    %31 = vmatpush.msra.mxu0 0.0
    %32 = vmatpush.msra.mxu0 0.0
    %33 = vmatpush.msra.mxu0 0.0
    %34 = vmatpush.msra.mxu0 0.0
    %35 = vmatpush.msra.mxu0 0.0
    %36 = vmatpush.msra.mxu0 %v19
    %37 = vmatpush.msra.mxu0 %v18
    %38 = vmatpush.msra.mxu0 %v17
    %39 = vmatpush.msra.mxu0 %v16
    %40 = vmatmul.f32.gmra.mxu0 %v22
    %v41 = vpop.f32.mrf.mxu0
    %v42 = vadd.f32 0.0, %v41
    %43 = vdwg.mxu0
    %v44 = vmul.f32 %v15, %v15
    %v45 = vsel %vm20, %v44, 0.0
    %46 = vadd.xlane.f32.xlu0 %v45
    %v47 = vpop.xlane.xlu0 %46
    %v48 = vld [vmem:[%s2] sm:$0x1]
    %v50 = vperm.slane %v48, 0
    %v52 = vadd.f32 %v47, %v50
    %v53 = vmul.f32 %v42, 2.0
    %v54 = vsub.f32 %v52, %v53
    %v55 = vmax.f32 %v54, 0.0
    %v56 = vadd.f32 %v55, 1.0
    %v57 = vrcp.pop %v56
    %vm58 = vcmask 64512
    %v59 = vsel %vm58, %v57, 0.0
    %60 = vadd.xlane.f32.xlu0 %v59
    %v61 = vpop.xlane.xlu0 %60
    %v62 = vrcp.pop %v61
    %v63 = vmul.f32 %v57, %v62
    %64 = vst.msk [vmem:[#allocation2] sm:$0xff] %vm58, %v63
    // Predicated region
    $region14: #{tpu_custom_call.1} parent=1 // pred_check
      _
    $region15: #{tpu_custom_call.1} parent=1 // pred_check_branch
      %66 = sbr.rel (0) target = $region17
    $region16: #{tpu_custom_call.1} parent=1 // pred_region
      %68 = vsyncadd [#allocation3], 0
      %s70 = sshll.u32 [#allocation2], 4
      %s71 = int_to_ptr.vmem [resolvable:$true] %s70
      %s72 = sshll.u32 %s3, 4
      %s73 = int_to_ptr.hbm [resolvable:$true] %s72
      %75 = dma.vmem_to_hbm [thread:$0]  %s71, 128, %s73, [#allocation3]
    $region17: #{tpu_custom_call.1} parent=1 // pred_fallthru
      _
    // Predicated region
    $region18: #{tpu_custom_call.1} parent=1 // pred_check
      _
    $region19: #{tpu_custom_call.1} parent=1 // pred_check_branch
      %77 = sbr.rel (0) target = $region21
    $region20: #{tpu_custom_call.1} parent=1 // pred_region
      %79 = dma.done [#allocation3], 128
    $region21: #{tpu_custom_call.1} parent=1 // pred_fallthru
      _
    %80 = vsyncpa [#allocation3], 1

</llo_original>
